<compile_context>
chip_gen: v6e
topology: v6e:2x2x1
jax: 0.10.0
libtpu: 0.0.40
codegen_flags: <defaults>
</compile_context>

<pallas_src>
import jax
import jax.numpy as jnp
from jax.experimental import pallas as pl
from jax.experimental.pallas import tpu as pltpu

SCALE = 1.0 / 0.6


def _scaled_silu_kernel(x_ref, o_ref):
    x = x_ref[...]
    # Native low-precision compute on bf16/f16 (cheap on v6e/v7x, harmless on
    # v5e where the compiler promotes); everything else in f32 for accuracy.
    if x.dtype in (jnp.bfloat16, jnp.float16):
        xc = x
    else:
        xc = x.astype(jnp.float32)
    y = xc * jax.nn.sigmoid(xc) * SCALE  # SiLU(x) * (1/0.6); scale stays in-kernel
    o_ref[...] = y.astype(o_ref.dtype)


def scaled_silu(x, *, target_block_bytes=2 * 1024 * 1024):
    """Elementwise ScaledSiLU on any shape/dtype via lane-dense flat tiling."""
    orig_shape = x.shape
    n = x.size
    if n == 0:
        return x

    itemsize = jnp.dtype(x.dtype).itemsize
    flat = x.reshape(-1)

    # Widest lane-dense column count (multiple of 128) that divides n, so the
    # reshape is a free view.  Only a non-128-multiple total size needs a pad.
    cols = None
    for c in (4096, 2048, 1024, 512, 256, 128):
        if n % c == 0:
            cols = c
            break
    pad = 0
    if cols is None:
        cols = 128
        pad = (-n) % cols
        flat = jnp.pad(flat, (0, pad))  # ragged fallback: tail-only pad

    x2 = flat.reshape(-1, cols)
    rows = x2.shape[0]

    # Sublane packing multiple: 8 (4-byte), 16 (2-byte), 32 (1-byte).
    sub = max(8, 32 // itemsize)
    # Aim for ~target_block_bytes per block, as a multiple of `sub`.
    block_rows = max(sub, (target_block_bytes // (cols * itemsize)) // sub * sub)
    if rows <= block_rows:
        block_rows = rows  # single block == full array extent (always legal)
    grid = pl.cdiv(rows, block_rows)  # ragged last block masked by Pallas

    out = pl.pallas_call(
        _scaled_silu_kernel,
        out_shape=jax.ShapeDtypeStruct((rows, cols), x.dtype),
        grid_spec=pltpu.PrefetchScalarGridSpec(
            num_scalar_prefetch=0,
            grid=(grid,),
            in_specs=[pl.BlockSpec((block_rows, cols), lambda i: (i, 0))],
            out_specs=pl.BlockSpec((block_rows, cols), lambda i: (i, 0)),
        ),
        compiler_params=pltpu.CompilerParams(
            dimension_semantics=("parallel",),
        ),
    )(x2)

    out_flat = out.reshape(-1)
    if pad:
        out_flat = out_flat[:n]
    return out_flat.reshape(orig_shape)


def scaled_silu_ref(x):
    xf = x.astype(jnp.float32)
    return (xf * jax.nn.sigmoid(xf) * SCALE).astype(x.dtype)


if __name__ == "__main__":
    key = jax.random.PRNGKey(0)

    # Typical feature tensor (batch=2, nodes=16, hidden=128).
    x = jax.random.normal(key, (2, 16, 128), dtype=jnp.float32)
    y = scaled_silu(x)
    jax.block_until_ready(y)
    y_ref = scaled_silu_ref(x)
    assert y.shape == x.shape and y.dtype == x.dtype
    assert jnp.allclose(y, y_ref, atol=1e-5, rtol=1e-5)

    # Ragged shape (total size not a multiple of 128) exercises the tail-pad path.
    x2 = jax.random.normal(jax.random.PRNGKey(1), (3, 7, 5), dtype=jnp.float32)
    y2 = scaled_silu(x2)
    jax.block_until_ready(y2)
    assert y2.shape == x2.shape
    assert jnp.allclose(y2, scaled_silu_ref(x2), atol=1e-5, rtol=1e-5)

    # bf16 path (native low-precision compute).
    x3 = jax.random.normal(jax.random.PRNGKey(2), (4, 32, 128), dtype=jnp.bfloat16)
    y3 = scaled_silu(x3)
    jax.block_until_ready(y3)
    assert y3.dtype == jnp.bfloat16
    assert jnp.allclose(y3.astype(jnp.float32),
                        scaled_silu_ref(x3).astype(jnp.float32),
                        atol=2e-2, rtol=2e-2)

    # Larger multi-block tensor (exercises the tiled grid + parallel semantics).
    x4 = jax.random.normal(jax.random.PRNGKey(3), (8, 512, 512), dtype=jnp.float32)
    y4 = scaled_silu(x4)
    jax.block_until_ready(y4)
    assert jnp.allclose(y4, scaled_silu_ref(x4), atol=1e-5, rtol=1e-5)

    print("KERNEL_OK")
</pallas_src>

<mosaic_0001>
module attributes {stable_mosaic.version = 11 : i64} {
  func.func @_scaled_silu_kernel(%arg0: i32, %arg1: memref<1x4096xf32, #tpu.memory_space<vmem>>, %arg2: memref<1x4096xf32, #tpu.memory_space<vmem>>) attributes {dimension_semantics = [#tpu.dimension_semantics<parallel>], iteration_bounds = array<i64: 1>, scalar_prefetch = 0 : i64, scratch_operands = 0 : i64, tpu.core_type = #tpu.core_type<tc>, window_params = [{transform_indices = @transform_0, window_bounds = array<i64: 1, 4096>}, {transform_indices = @transform_1, window_bounds = array<i64: 1, 4096>}]} {
    %c0 = arith.constant 0 : index
    %c0_0 = arith.constant 0 : index
    %0 = vector.load %arg1[%c0, %c0_0] : memref<1x4096xf32, #tpu.memory_space<vmem>>, vector<1x4096xf32>
    %1 = arith.negf %0 : vector<1x4096xf32>
    %2 = math.exp %1 : vector<1x4096xf32>
    %cst = arith.constant 1.000000e+00 : f32
    %3 = vector.broadcast %cst : f32 to vector<1x4096xf32>
    %4 = arith.addf %3, %2 : vector<1x4096xf32>
    %5 = arith.divf %3, %4 : vector<1x4096xf32>
    %6 = arith.mulf %0, %5 : vector<1x4096xf32>
    %cst_1 = arith.constant 1.66666663 : f32
    %7 = vector.broadcast %cst_1 : f32 to vector<1x4096xf32>
    %8 = arith.mulf %6, %7 : vector<1x4096xf32>
    %c0_2 = arith.constant 0 : index
    %c0_3 = arith.constant 0 : index
    %9 = vector.load %arg2[%c0_2, %c0_3] : memref<1x4096xf32, #tpu.memory_space<vmem>>, vector<1x4096xf32>
    tpu.vector_store %arg2[%c0_2, %c0_3], %8 {strides = array<i32>} : memref<1x4096xf32, #tpu.memory_space<vmem>>, vector<1x4096xf32>,
    return
  }
  func.func @transform_0(%arg0: i32) -> (i32, i32) {
    %c0_i32 = arith.constant 0 : i32
    %c0_i32_0 = arith.constant 0 : i32
    return %arg0, %c0_i32 : i32, i32
  }
  func.func @transform_1(%arg0: i32) -> (i32, i32) {
    %c0_i32 = arith.constant 0 : i32
    %c0_i32_0 = arith.constant 0 : i32
    return %arg0, %c0_i32 : i32, i32
  }
}

</mosaic_0001>

<llo_original>
// kernel: tpu_custom_call.1
$region0: #{tpu_custom_call.1}
  #allocation0 [shape = 'u32[]', space=smem, size = 0x4, offset = 0x4, fixed_abs, tag = 'smem constant byte address 0x4 - core index']
  #allocation1 [shape = 'u32[144,128]{1,0:T(1,128)}', space=vmem, size = 0x12000, scoped, tag = 'internal scratch']
  %s0 = inlined_call_operand.hbm [shape: f32[1,4096], index: 0, kind: input, shape index: {}]
  %s1 = inlined_call_operand.hbm [shape: f32[1,4096], index: 1, kind: output, shape index: {}]
  %s2 = sld [smem:[#allocation0]]
  $region18: #{tpu_custom_call.1} parent=0
    _
  %s4 = ssub.s32 1, %s2
  %s5 = scalar_select 0, %s4, %s2
  $region1: #{tpu_custom_call.1} parent=0
    #allocation2 [shape = 'u8[16384]{0}', space=vmem, size = 0x4000, scoped, tag = 'input window, operand 0, single buffered']
    #allocation3 [shape = 's32[1]{0}', space=sflag, size = 0x4, scoped, tag = 'scoped memory for tpu_custom_call.1']
    #allocation4 [shape = 's32[1]{0}', space=sflag, size = 0x4, scoped, tag = 'scoped memory for tpu_custom_call.1']
    #allocation5 [shape = 'u8[16384]{0}', space=vmem, size = 0x4000, scoped, tag = 'output window, operand 0, single buffered']
    %6 = vsyncpa [#allocation3], 0
    %7 = vsyncpa [#allocation4], 0
    // Predicated region
    $region2: #{tpu_custom_call.1} parent=1 // pred_check
      _
    $region3: #{tpu_custom_call.1} parent=1 // pred_check_branch
      %9 = sbr.rel (0) target = $region5
    $region4: #{tpu_custom_call.1} parent=1 // pred_region
      %s11 = ssub.s32 512, 512
      %12 = vsyncadd [#allocation3], %s11
      %s14 = sshll.u32 [#allocation2], 4
      %s15 = int_to_ptr.vmem [resolvable:$true] %s14
      %17 = dma.hbm_to_vmem [thread:$0]  %s0, 512, %s15, [#allocation3]
    $region5: #{tpu_custom_call.1} parent=1 // pred_fallthru
      _
    // Predicated region
    $region6: #{tpu_custom_call.1} parent=1 // pred_check
      _
    $region7: #{tpu_custom_call.1} parent=1 // pred_check_branch
      %19 = sbr.rel (0) target = $region9
    $region8: #{tpu_custom_call.1} parent=1 // pred_region
      %20 = dma.done [#allocation3], 512
    $region9: #{tpu_custom_call.1} parent=1 // pred_fallthru
      _
    %v21 = vld [vmem:[#allocation2] sm:$0xff]
    %v22 = vld [vmem:[#allocation2 + $0x8] sm:$0xff]
    %v23 = vld [vmem:[#allocation2 + $0x10] sm:$0xff]
    %v24 = vld [vmem:[#allocation2 + $0x18] sm:$0xff]
    %v25 = vxor.u32 %v21, 2147483648
    %v26 = vxor.u32 %v22, 2147483648
    %v27 = vxor.u32 %v23, 2147483648
    %v28 = vxor.u32 %v24, 2147483648
    %v29 = vmul.f32 %v25, 1.442695
    %v30 = vpow.pop %v29
    %v31 = vmul.f32 %v26, 1.442695
    %v32 = vpow.pop %v31
    %v33 = vmul.f32 %v27, 1.442695
    %v34 = vpow.pop %v33
    %v35 = vmul.f32 %v28, 1.442695
    %v36 = vpow.pop %v35
    %v37 = vadd.f32 %v30, 1.0
    %v38 = vadd.f32 %v32, 1.0
    %v39 = vadd.f32 %v34, 1.0
    %v40 = vadd.f32 %v36, 1.0
    %v41 = vrcp.pop %v37
    %v42 = vmul.f32 1.0, %v41
    %v43 = vrcp.pop %v38
    %v44 = vmul.f32 1.0, %v43
    %v45 = vrcp.pop %v39
    %v46 = vmul.f32 1.0, %v45
    %v47 = vrcp.pop %v40
    %v48 = vmul.f32 1.0, %v47
    %v49 = vmul.f32 %v21, %v42
    %v50 = vmul.f32 %v22, %v44
    %v51 = vmul.f32 %v23, %v46
    %v52 = vmul.f32 %v24, %v48
    %v53 = vmul.f32 %v49, 1.6666666
    %v54 = vmul.f32 %v50, 1.6666666
    %v55 = vmul.f32 %v51, 1.6666666
    %v56 = vmul.f32 %v52, 1.6666666
    %57 = vst [vmem:[#allocation5] sm:$0xff] %v53
    %58 = vst [vmem:[#allocation5 + $0x8] sm:$0xff] %v54
    %59 = vst [vmem:[#allocation5 + $0x10] sm:$0xff] %v55
    %60 = vst [vmem:[#allocation5 + $0x18] sm:$0xff] %v56
    // Predicated region
    $region10: #{tpu_custom_call.1} parent=1 // pred_check
      _
    $region11: #{tpu_custom_call.1} parent=1 // pred_check_branch
      %62 = sbr.rel (0) target = $region13
    $region12: #{tpu_custom_call.1} parent=1 // pred_region
      %s64 = ssub.s32 512, 512
      %65 = vsyncadd [#allocation4], %s64
      %s67 = sshll.u32 [#allocation5], 4
      %s68 = int_to_ptr.vmem [resolvable:$true] %s67
      %70 = dma.vmem_to_hbm [thread:$0]  %s68, 512, %s1, [#allocation4]
    $region13: #{tpu_custom_call.1} parent=1 // pred_fallthru
      _
    // Predicated region
    $region14: #{tpu_custom_call.1} parent=1 // pred_check
      _
    $region15: #{tpu_custom_call.1} parent=1 // pred_check_branch
      %72 = sbr.rel (0) target = $region17
    $region16: #{tpu_custom_call.1} parent=1 // pred_region
      %73 = dma.done [#allocation4], 512
    $region17: #{tpu_custom_call.1} parent=1 // pred_fallthru
      _
    %74 = vsyncpa [#allocation3], 1
    %75 = vsyncpa [#allocation4], 1

</llo_original>
